<compile_context>
chip_gen: v7x
topology: tpu7x:2x2x1
jax: 0.10.0
libtpu: 0.0.40
codegen_flags: <defaults>
</compile_context>

<pallas_src>
import jax
import jax.numpy as jnp
from jax.experimental import pallas as pl
from jax.experimental.pallas import tpu as pltpu

HIDDEN = 30
H_PAD = 128     # hidden padded to a full lane width (VMEM-only intermediate)
A_PAD = 8       # nb_action padded only to 8 lanes -> small output writeback
MAX_TB = 2048   # max batch rows per grid step (double-buffered VMEM ~3 MiB)


def _round_up(x: int, m: int) -> int:
    return (x + m - 1) // m * m


def mlp_kernel(x_ref, w1_ref, b1_ref, w2_ref, b2_ref, o_ref):
    # fc1 (MXU) + bias + ReLU (VPU), then fc2 (MXU) + bias.
    h = jnp.dot(x_ref[...], w1_ref[...], preferred_element_type=jnp.float32)
    h = jnp.maximum(h + b1_ref[...], 0.0)          # b1 is (1, H_PAD) -> broadcasts
    q = jnp.dot(h, w2_ref[...], preferred_element_type=jnp.float32)
    o_ref[...] = (q + b2_ref[...]).astype(o_ref.dtype)


def prepare_params(w1, b1, w2, b2):
    """Pad parameters ONCE (hoisted out of the per-forward hot path).

    w1: (input_size, 30)  b1: (30,)  w2: (30, nb_action)  b2: (nb_action,)
    Returns lane-padded copies (zero padding is numerically exact).
    """
    H = w1.shape[1]
    A = w2.shape[1]
    assert H <= H_PAD and A <= A_PAD
    w1p = jnp.pad(w1, ((0, 0), (0, H_PAD - H)))
    b1p = jnp.pad(b1, (0, H_PAD - H)).reshape(1, H_PAD)
    w2p = jnp.pad(w2, ((0, H_PAD - H), (0, A_PAD - A)))
    b2p = jnp.pad(b2, (0, A_PAD - A)).reshape(1, A_PAD)
    return w1p, b1p, w2p, b2p


def _batch_tiling(B: int):
    """Pick (TB, n_steps): single step for typical batches, even grid length
    when multiple tiles are needed (balanced across v7x's 2 TensorCores)."""
    B8 = _round_up(B, 8)                      # f32 sublane multiple
    if B8 <= MAX_TB:
        return B8, 1
    n = -(-B8 // MAX_TB)                      # cdiv
    if n % 2:
        n += 1                                # even grid -> balanced 2-TC split
    TB = _round_up(-(-B8 // n), 8)
    return TB, n


def network_forward(state, padded_params, nb_action):
    """Fused forward of `network` as a single batch-tiled Pallas TPU kernel.

    state:         (B, input_size) float32
    padded_params: output of prepare_params (padded once, reused every call)
    returns q_values: (B, nb_action) float32
    """
    w1p, b1p, w2p, b2p = padded_params
    B, in_size = state.shape

    TB, n_steps = _batch_tiling(B)
    Bp = TB * n_steps
    xp = state if Bp == B else jnp.pad(state, ((0, Bp - B), (0, 0)))

    out_padded = pl.pallas_call(
        mlp_kernel,
        out_shape=jax.ShapeDtypeStruct((Bp, A_PAD), jnp.float32),
        grid=(n_steps,),
        in_specs=[
            # activations: tiled over batch; contraction dim (in_size) NOT padded
            pl.BlockSpec((TB, in_size), lambda i: (i, 0)),
            # weights / biases: same block every step -> stay resident in VMEM
            pl.BlockSpec((in_size, H_PAD), lambda i: (0, 0)),
            pl.BlockSpec((1, H_PAD), lambda i: (0, 0)),
            pl.BlockSpec((H_PAD, A_PAD), lambda i: (0, 0)),
            pl.BlockSpec((1, A_PAD), lambda i: (0, 0)),
        ],
        out_specs=pl.BlockSpec((TB, A_PAD), lambda i: (i, 0)),
        compiler_params=pltpu.CompilerParams(
            dimension_semantics=("parallel",),
        ),
    )(xp, w1p, b1p, w2p, b2p)

    return out_padded[:B, :nb_action]


def init_params(key, input_size, nb_action, hidden=HIDDEN):
    """Deterministic init mimicking PyTorch nn.Linear default:
    U(-1/sqrt(fan_in), 1/sqrt(fan_in)) for both weight and bias."""
    k1, k2, k3, k4 = jax.random.split(key, 4)
    bound1 = 1.0 / jnp.sqrt(jnp.float32(input_size))
    bound2 = 1.0 / jnp.sqrt(jnp.float32(hidden))
    w1 = jax.random.uniform(k1, (input_size, hidden), jnp.float32, -bound1, bound1)
    b1 = jax.random.uniform(k2, (hidden,), jnp.float32, -bound1, bound1)
    w2 = jax.random.uniform(k3, (hidden, nb_action), jnp.float32, -bound2, bound2)
    b2 = jax.random.uniform(k4, (nb_action,), jnp.float32, -bound2, bound2)
    return w1, b1, w2, b2


def _reference(state, w1, b1, w2, b2):
    return jnp.maximum(state @ w1 + b1, 0.0) @ w2 + b2


if __name__ == "__main__":
    key = jax.random.PRNGKey(0)
    input_size = 5      # self-driving-car env: 3 sensor signals + orientation + -orientation
    nb_action = 3

    k_x, k_x2, k_x3, k_p = jax.random.split(key, 4)
    w1, b1, w2, b2 = init_params(k_p, input_size, nb_action)
    padded_params = prepare_params(w1, b1, w2, b2)   # pad ONCE, reuse every call

    # --- small-shape check (grid=1, batch padded 2 -> 8) ----------------------
    state_small = jax.random.normal(k_x, (2, input_size), jnp.float32)
    q_small = network_forward(state_small, padded_params, nb_action)
    jax.block_until_ready(q_small)
    ref_small = _reference(state_small, w1, b1, w2, b2)
    assert q_small.shape == (2, nb_action)
    assert jnp.allclose(q_small, ref_small, atol=1e-5, rtol=1e-5)

    # --- medium batch: still a single grid step (TB = 1032) -------------------
    state_mid = jax.random.normal(k_x2, (1029, input_size), jnp.float32)
    q_mid = network_forward(state_mid, padded_params, nb_action)
    jax.block_until_ready(q_mid)
    ref_mid = _reference(state_mid, w1, b1, w2, b2)
    assert q_mid.shape == (1029, nb_action)
    assert jnp.allclose(q_mid, ref_mid, atol=1e-5, rtol=1e-5)

    # --- large batch: exercises the even-length multi-step grid path ----------
    state_big = jax.random.normal(k_x3, (4500, input_size), jnp.float32)
    q_big = network_forward(state_big, padded_params, nb_action)
    jax.block_until_ready(q_big)
    ref_big = _reference(state_big, w1, b1, w2, b2)
    assert q_big.shape == (4500, nb_action)
    assert jnp.allclose(q_big, ref_big, atol=1e-5, rtol=1e-5)

    print("KERNEL_OK")
</pallas_src>

<mosaic_0001>
module attributes {stable_mosaic.version = 11 : i64} {
  func.func @mlp_kernel(%arg0: i32, %arg1: memref<8x5xf32, #tpu.memory_space<vmem>>, %arg2: memref<5x128xf32, #tpu.memory_space<vmem>>, %arg3: memref<1x128xf32, #tpu.memory_space<vmem>>, %arg4: memref<128x8xf32, #tpu.memory_space<vmem>>, %arg5: memref<1x8xf32, #tpu.memory_space<vmem>>, %arg6: memref<8x8xf32, #tpu.memory_space<vmem>>) attributes {dimension_semantics = [#tpu.dimension_semantics<parallel>], iteration_bounds = array<i64: 1>, scalar_prefetch = 0 : i64, scratch_operands = 0 : i64, tpu.core_type = #tpu.core_type<tc>, window_params = [{transform_indices = @transform_0, window_bounds = array<i64: 8, 5>}, {pipeline_mode = #tpu.pipeline_mode<synchronous>, transform_indices = @transform_1, window_bounds = array<i64: 5, 128>}, {pipeline_mode = #tpu.pipeline_mode<synchronous>, transform_indices = @transform_2, window_bounds = array<i64: 1, 128>}, {pipeline_mode = #tpu.pipeline_mode<synchronous>, transform_indices = @transform_3, window_bounds = array<i64: 128, 8>}, {pipeline_mode = #tpu.pipeline_mode<synchronous>, transform_indices = @transform_4, window_bounds = array<i64: 1, 8>}, {transform_indices = @transform_5, window_bounds = array<i64: 8, 8>}]} {
    %c0 = arith.constant 0 : index
    %c0_0 = arith.constant 0 : index
    %0 = vector.load %arg1[%c0, %c0_0] : memref<8x5xf32, #tpu.memory_space<vmem>>, vector<8x5xf32>
    %c0_1 = arith.constant 0 : index
    %c0_2 = arith.constant 0 : index
    %1 = vector.load %arg2[%c0_1, %c0_2] : memref<5x128xf32, #tpu.memory_space<vmem>>, vector<5x128xf32>
    %cst = arith.constant dense<0.000000e+00> : vector<8x128xf32>
    %2 = tpu.matmul %0, %1, %cst {dimension_numbers = #tpu.dot_dimension_numbers<[1], [0], [0], [1], [0, 0, 1, 1], [], []>} : vector<8x5xf32>, vector<5x128xf32>, vector<8x128xf32> -> vector<8x128xf32>
    %c0_3 = arith.constant 0 : index
    %c0_4 = arith.constant 0 : index
    %3 = vector.load %arg3[%c0_3, %c0_4] : memref<1x128xf32, #tpu.memory_space<vmem>>, vector<1x128xf32>
    %4 = vector.broadcast %3 : vector<1x128xf32> to vector<8x128xf32>
    %5 = arith.addf %2, %4 : vector<8x128xf32>
    %cst_5 = arith.constant 0.000000e+00 : f32
    %6 = vector.broadcast %cst_5 : f32 to vector<8x128xf32>
    %7 = arith.maximumf %5, %6 : vector<8x128xf32>
    %c0_6 = arith.constant 0 : index
    %c0_7 = arith.constant 0 : index
    %8 = vector.load %arg4[%c0_6, %c0_7] : memref<128x8xf32, #tpu.memory_space<vmem>>, vector<128x8xf32>
    %cst_8 = arith.constant dense<0.000000e+00> : vector<8x8xf32>
    %9 = tpu.matmul %7, %8, %cst_8 {dimension_numbers = #tpu.dot_dimension_numbers<[1], [0], [0], [1], [0, 0, 1, 1], [], []>} : vector<8x128xf32>, vector<128x8xf32>, vector<8x8xf32> -> vector<8x8xf32>
    %c0_9 = arith.constant 0 : index
    %c0_10 = arith.constant 0 : index
    %10 = vector.load %arg5[%c0_9, %c0_10] : memref<1x8xf32, #tpu.memory_space<vmem>>, vector<1x8xf32>
    %11 = vector.broadcast %10 : vector<1x8xf32> to vector<8x8xf32>
    %12 = arith.addf %9, %11 : vector<8x8xf32>
    %c0_11 = arith.constant 0 : index
    %c0_12 = arith.constant 0 : index
    %13 = vector.load %arg6[%c0_11, %c0_12] : memref<8x8xf32, #tpu.memory_space<vmem>>, vector<8x8xf32>
    tpu.vector_store %arg6[%c0_11, %c0_12], %12 {strides = array<i32>} : memref<8x8xf32, #tpu.memory_space<vmem>>, vector<8x8xf32>,
    return
  }
  func.func @transform_0(%arg0: i32) -> (i32, i32) {
    %c0_i32 = arith.constant 0 : i32
    %c0_i32_0 = arith.constant 0 : i32
    return %arg0, %c0_i32 : i32, i32
  }
  func.func @transform_1(%arg0: i32) -> (i32, i32) {
    %c0_i32 = arith.constant 0 : i32
    %c0_i32_0 = arith.constant 0 : i32
    %c0_i32_1 = arith.constant 0 : i32
    return %c0_i32, %c0_i32_0 : i32, i32
  }
  func.func @transform_2(%arg0: i32) -> (i32, i32) {
    %c0_i32 = arith.constant 0 : i32
    %c0_i32_0 = arith.constant 0 : i32
    %c0_i32_1 = arith.constant 0 : i32
    return %c0_i32, %c0_i32_0 : i32, i32
  }
  func.func @transform_3(%arg0: i32) -> (i32, i32) {
    %c0_i32 = arith.constant 0 : i32
    %c0_i32_0 = arith.constant 0 : i32
    %c0_i32_1 = arith.constant 0 : i32
    return %c0_i32, %c0_i32_0 : i32, i32
  }
  func.func @transform_4(%arg0: i32) -> (i32, i32) {
    %c0_i32 = arith.constant 0 : i32
    %c0_i32_0 = arith.constant 0 : i32
    %c0_i32_1 = arith.constant 0 : i32
    return %c0_i32, %c0_i32_0 : i32, i32
  }
  func.func @transform_5(%arg0: i32) -> (i32, i32) {
    %c0_i32 = arith.constant 0 : i32
    %c0_i32_0 = arith.constant 0 : i32
    return %arg0, %c0_i32 : i32, i32
  }
}

</mosaic_0001>

<llo_original>
// kernel: tpu_custom_call.1
$region0: #{tpu_custom_call.1}
  #allocation0 [shape = 'u32[]', space=smem, size = 0x4, offset = 0x4, fixed_abs, tag = 'smem constant byte address 0x4 - core index']
  #allocation1 [shape = 'u32[144,128]{1,0:T(1,128)}', space=vmem, size = 0x12000, scoped, tag = 'internal scratch']
  %s0 = inlined_call_operand.vmem [shape: f32[8,5], index: 0, kind: input, shape index: {}]
  %s1 = inlined_call_operand.vmem [shape: f32[5,128], index: 1, kind: input, shape index: {}]
  %s2 = inlined_call_operand.vmem [shape: f32[1,128], index: 2, kind: input, shape index: {}]
  %s3 = inlined_call_operand.vmem [shape: f32[128,8], index: 3, kind: input, shape index: {}]
  %s4 = inlined_call_operand.vmem [shape: f32[1,8], index: 4, kind: input, shape index: {}]
  %s5 = inlined_call_operand.hbm [shape: f32[8,8], index: 5, kind: output, shape index: {}]
  %s6 = sld [smem:[#allocation0]]
  $region30: #{tpu_custom_call.1} parent=0
    _
  %s8 = ssub.s32 1, %s6
  %s9 = scalar_select 0, %s8, %s6
  $region1: #{tpu_custom_call.1} parent=0
    #allocation2 [shape = 'u8[4096]{0}', space=vmem, size = 0x1000, scoped, tag = 'output window, operand 0, single buffered']
    #allocation3 [shape = 's32[1]{0}', space=sflag, size = 0x4, scoped, tag = 'scoped memory for tpu_custom_call.1']
    %10 = vsyncpa [#allocation3], 0
    // Predicated region
    $region2: #{tpu_custom_call.1} parent=1 // pred_check
      _
    $region3: #{tpu_custom_call.1} parent=1 // pred_check_branch
      %12 = sbr.rel (0) target = $region5
    $region4: #{tpu_custom_call.1} parent=1 // pred_region
      _
    $region5: #{tpu_custom_call.1} parent=1 // pred_fallthru
      _
    // Predicated region
    $region6: #{tpu_custom_call.1} parent=1 // pred_check
      _
    $region7: #{tpu_custom_call.1} parent=1 // pred_check_branch
      %14 = sbr.rel (0) target = $region9
    $region8: #{tpu_custom_call.1} parent=1 // pred_region
      _
    $region9: #{tpu_custom_call.1} parent=1 // pred_fallthru
      _
    // Predicated region
    $region10: #{tpu_custom_call.1} parent=1 // pred_check
      _
    $region11: #{tpu_custom_call.1} parent=1 // pred_check_branch
      %16 = sbr.rel (0) target = $region13
    $region12: #{tpu_custom_call.1} parent=1 // pred_region
      _
    $region13: #{tpu_custom_call.1} parent=1 // pred_fallthru
      _
    // Predicated region
    $region14: #{tpu_custom_call.1} parent=1 // pred_check
      _
    $region15: #{tpu_custom_call.1} parent=1 // pred_check_branch
      %18 = sbr.rel (0) target = $region17
    $region16: #{tpu_custom_call.1} parent=1 // pred_region
      _
    $region17: #{tpu_custom_call.1} parent=1 // pred_fallthru
      _
    // Predicated region
    $region18: #{tpu_custom_call.1} parent=1 // pred_check
      _
    $region19: #{tpu_custom_call.1} parent=1 // pred_check_branch
      %20 = sbr.rel (0) target = $region21
    $region20: #{tpu_custom_call.1} parent=1 // pred_region
      _
    $region21: #{tpu_custom_call.1} parent=1 // pred_fallthru
      _
    %v21 = vld [vmem:[%s0] sm:$0xff]
    %v22 = vld [vmem:[%s1] sm:$0x1f]
    %v23 = vld [vmem:[%s2] sm:$0x1]
    %v25 = vlaneseq
    %v26 = vshrl.u32 %v25, 7
    %v27 = vsub.s32 0, %v26
    %v28 = vrot.slane %v23, %v27
    %vm30 = vcmask 39936
    %v32 = vsel %vm30, %v21, 0
    %vm34 = vcmask 1044480
    %v36 = vsel %vm34, %v22, 0
    %38 = vmatprep.subr.mxu0 0.0
    %39 = vmatpush1.msra.mxu0 %v36
    %40 = vmatprep.subr.mxu0 0.0
    %41 = vmatpush1.msra.mxu0 0.0
    %42 = vmatprep.subr.mxu0 0.0
    %43 = vmatpush1.msra.mxu0 0.0
    %44 = vmatprep.subr.mxu0 0.0
    %45 = vmatpush1.msra.mxu0 0.0
    %46 = vmatprep.subr.mxu0 0.0
    %47 = vmatpush1.msra.mxu0 0.0
    %48 = vmatprep.subr.mxu0 0.0
    %49 = vmatpush1.msra.mxu0 0.0
    %50 = vmatprep.subr.mxu0 0.0
    %51 = vmatpush1.msra.mxu0 0.0
    %52 = vmatprep.subr.mxu0 0.0
    %53 = vmatpush1.msra.mxu0 0.0
    %54 = vmatprep.subr.mxu0 0.0
    %55 = vmatpush1.msra.mxu0 0.0
    %56 = vmatprep.subr.mxu0 0.0
    %57 = vmatpush1.msra.mxu0 0.0
    %58 = vmatprep.subr.mxu0 0.0
    %59 = vmatpush1.msra.mxu0 0.0
    %60 = vmatprep.subr.mxu0 0.0
    %61 = vmatpush1.msra.mxu0 0.0
    %62 = vmatprep.subr.mxu0 0.0
    %63 = vmatpush1.msra.mxu0 0.0
    %64 = vmatprep.subr.mxu0 0.0
    %65 = vmatpush1.msra.mxu0 0.0
    %66 = vmatprep.subr.mxu0 0.0
    %67 = vmatpush1.msra.mxu0 0.0
    %68 = vmatprep.subr.mxu0 0.0
    %69 = vmatpush1.msra.mxu0 0.0
    %70 = vmatprep.subr.mxu0 0.0
    %71 = vmatpush1.msra.mxu0 0.0
    %72 = vmatprep.subr.mxu0 0.0
    %73 = vmatpush1.msra.mxu0 0.0
    %74 = vmatprep.subr.mxu0 0.0
    %75 = vmatpush1.msra.mxu0 0.0
    %76 = vmatprep.subr.mxu0 0.0
    %77 = vmatpush1.msra.mxu0 0.0
    %78 = vmatprep.subr.mxu0 0.0
    %79 = vmatpush1.msra.mxu0 0.0
    %80 = vmatprep.subr.mxu0 0.0
    %81 = vmatpush1.msra.mxu0 0.0
    %82 = vmatprep.subr.mxu0 0.0
    %83 = vmatpush1.msra.mxu0 0.0
    %84 = vmatprep.subr.mxu0 0.0
    %85 = vmatpush1.msra.mxu0 0.0
    %86 = vmatprep.subr.mxu0 0.0
    %87 = vmatpush1.msra.mxu0 0.0
    %88 = vmatprep.subr.mxu0 0.0
    %89 = vmatpush1.msra.mxu0 0.0
    %90 = vmatprep.subr.mxu0 0.0
    %91 = vmatpush1.msra.mxu0 0.0
    %92 = vmatprep.subr.mxu0 0.0
    %93 = vmatpush1.msra.mxu0 0.0
    %94 = vmatprep.subr.mxu0 0.0
    %95 = vmatpush1.msra.mxu0 0.0
    %96 = vmatprep.subr.mxu0 0.0
    %97 = vmatpush1.msra.mxu0 0.0
    %98 = vmatprep.subr.mxu0 0.0
    %99 = vmatpush1.msra.mxu0 0.0
    %100 = vmatprep.subr.mxu0 0.0
    %101 = vmatpush1.msra.mxu0 0.0
    %102 = vmatprep.mubr.f32.mxu0 0.0
    %103 = vmatmul.mubr.f32.gmra.mrb[0].mxu0 %v32
    %v104 = vpop.f32.mrb[0].mxu0
    %v105 = vadd.f32 %v28, %v104
    %v106 = vpop.f32.mrb[0].mxu0
    %107 = vdwg.mxu0
    %v108 = vmax.f32 %v105, 0.0
    %v109 = vld [vmem:[%s3] sm:$0xff]
    %v110 = vld [vmem:[%s3 + $0x8] sm:$0xff]
    %v111 = vld [vmem:[%s3 + $0x10] sm:$0xff]
    %v112 = vld [vmem:[%s3 + $0x18] sm:$0xff]
    %v113 = vld [vmem:[%s3 + $0x20] sm:$0xff]
    %v114 = vld [vmem:[%s3 + $0x28] sm:$0xff]
    %v115 = vld [vmem:[%s3 + $0x30] sm:$0xff]
    %v116 = vld [vmem:[%s3 + $0x38] sm:$0xff]
    %v117 = vld [vmem:[%s3 + $0x40] sm:$0xff]
    %v118 = vld [vmem:[%s3 + $0x48] sm:$0xff]
    %v119 = vld [vmem:[%s3 + $0x50] sm:$0xff]
    %v120 = vld [vmem:[%s3 + $0x58] sm:$0xff]
    %v121 = vld [vmem:[%s3 + $0x60] sm:$0xff]
    %v122 = vld [vmem:[%s3 + $0x68] sm:$0xff]
    %v123 = vld [vmem:[%s3 + $0x70] sm:$0xff]
    %v124 = vld [vmem:[%s3 + $0x78] sm:$0xff]
    %v125 = vld [vmem:[%s4] sm:$0x1]
    %v127 = vlaneseq
    %v128 = vshrl.u32 %v127, 7
    %v129 = vsub.s32 0, %v128
    %v130 = vrot.slane %v125, %v129
    %132 = vmatprep.subr.mxu0 0.0
    %133 = vmatpush1.msra.mxu0 %v109
    %134 = vmatprep.subr.mxu0 0.0
    %135 = vmatpush1.msra.mxu0 %v110
    %136 = vmatprep.subr.mxu0 0.0
    %137 = vmatpush1.msra.mxu0 %v111
    %138 = vmatprep.subr.mxu0 0.0
    %139 = vmatpush1.msra.mxu0 %v112
    %140 = vmatprep.subr.mxu0 0.0
    %141 = vmatpush1.msra.mxu0 %v113
    %142 = vmatprep.subr.mxu0 0.0
    %143 = vmatpush1.msra.mxu0 %v114
    %144 = vmatprep.subr.mxu0 0.0
    %145 = vmatpush1.msra.mxu0 %v115
    %146 = vmatprep.subr.mxu0 0.0
    %147 = vmatpush1.msra.mxu0 %v116
    %148 = vmatprep.subr.mxu0 0.0
    %149 = vmatpush1.msra.mxu0 %v117
    %150 = vmatprep.subr.mxu0 0.0
    %151 = vmatpush1.msra.mxu0 %v118
    %152 = vmatprep.subr.mxu0 0.0
    %153 = vmatpush1.msra.mxu0 %v119
    %154 = vmatprep.subr.mxu0 0.0
    %155 = vmatpush1.msra.mxu0 %v120
    %156 = vmatprep.subr.mxu0 0.0
    %157 = vmatpush1.msra.mxu0 %v121
    %158 = vmatprep.subr.mxu0 0.0
    %159 = vmatpush1.msra.mxu0 %v122
    %160 = vmatprep.subr.mxu0 0.0
    %161 = vmatpush1.msra.mxu0 %v123
    %162 = vmatprep.subr.mxu0 0.0
    %163 = vmatpush1.msra.mxu0 %v124
    %164 = vmatprep.subr.mxu0 0.0
    %165 = vmatpush1.msra.mxu0 0.0
    %166 = vmatprep.subr.mxu0 0.0
    %167 = vmatpush1.msra.mxu0 0.0
    %168 = vmatprep.subr.mxu0 0.0
    %169 = vmatpush1.msra.mxu0 0.0
    %170 = vmatprep.subr.mxu0 0.0
    %171 = vmatpush1.msra.mxu0 0.0
    %172 = vmatprep.subr.mxu0 0.0
    %173 = vmatpush1.msra.mxu0 0.0
    %174 = vmatprep.subr.mxu0 0.0
    %175 = vmatpush1.msra.mxu0 0.0
    %176 = vmatprep.subr.mxu0 0.0
    %177 = vmatpush1.msra.mxu0 0.0
    %178 = vmatprep.subr.mxu0 0.0
    %179 = vmatpush1.msra.mxu0 0.0
    %180 = vmatprep.subr.mxu0 0.0
    %181 = vmatpush1.msra.mxu0 0.0
    %182 = vmatprep.subr.mxu0 0.0
    %183 = vmatpush1.msra.mxu0 0.0
    %184 = vmatprep.subr.mxu0 0.0
    %185 = vmatpush1.msra.mxu0 0.0
    %186 = vmatprep.subr.mxu0 0.0
    %187 = vmatpush1.msra.mxu0 0.0
    %188 = vmatprep.subr.mxu0 0.0
    %189 = vmatpush1.msra.mxu0 0.0
    %190 = vmatprep.subr.mxu0 0.0
    %191 = vmatpush1.msra.mxu0 0.0
    %192 = vmatprep.subr.mxu0 0.0
    %193 = vmatpush1.msra.mxu0 0.0
    %194 = vmatprep.subr.mxu0 0.0
    %195 = vmatpush1.msra.mxu0 0.0
    %196 = vmatprep.mubr.f32.mxu0 0.0
    %197 = vmatmul.mubr.f32.gmra.mrb[0].mxu0 %v108
    %v198 = vpop.f32.mrb[0].mxu0
    %v199 = vadd.f32 %v130, %v198
    %v200 = vpop.f32.mrb[0].mxu0
    %201 = vdwg.mxu0
    %vm202 = vcmask 64512
    %203 = vst.msk [vmem:[#allocation2] sm:$0xff] %vm202, %v199
    // Predicated region
    $region22: #{tpu_custom_call.1} parent=1 // pred_check
      _
    $region23: #{tpu_custom_call.1} parent=1 // pred_check_branch
      %205 = sbr.rel (0) target = $region25
    $region24: #{tpu_custom_call.1} parent=1 // pred_region
      %s207 = ssub.s32 128, 128
      %208 = vsyncadd [#allocation3], %s207
      %s210 = sshll.u32 [#allocation2], 4
      %s211 = int_to_ptr.vmem [resolvable:$true] %s210
      %213 = dma.vmem_to_hbm [thread:$0]  %s211, 128, %s5, [#allocation3]
    $region25: #{tpu_custom_call.1} parent=1 // pred_fallthru
      _
    // Predicated region
    $region26: #{tpu_custom_call.1} parent=1 // pred_check
      _
    $region27: #{tpu_custom_call.1} parent=1 // pred_check_branch
      %215 = sbr.rel (0) target = $region29
    $region28: #{tpu_custom_call.1} parent=1 // pred_region
      %216 = dma.done [#allocation3], 128
    $region29: #{tpu_custom_call.1} parent=1 // pred_fallthru
      _
    %217 = vsyncpa [#allocation3], 1

</llo_original>
